<compile_context>
chip_gen: v6e
topology: v6e:2x2x1
jax: 0.10.0
libtpu: 0.0.40
codegen_flags: <defaults>
</compile_context>

<pallas_src>
from functools import partial

import jax
import jax.numpy as jnp
from jax.experimental import pallas as pl
from jax.experimental.pallas import tpu as pltpu


def _mlp_kernel(x_ref, w1_ref, b1_ref, w2_ref, b2_ref, o_ref, *, sub):
    # x_ref : (N, C_in, tile)   lanes = spatial (lane-dense)
    # w1_ref: (hid, C_in)  BN pre-folded        b1_ref: (hid, 1)   f32
    # w2_ref: (C_out, hid)                      b2_ref: (C_out, 1) f32
    # o_ref : (N, C_out, tile)
    n_batch, _, tile = x_ref.shape
    n_chunks = tile // sub

    w1 = w1_ref[...]           # hoisted; VMEM-resident across the grid
    b1 = b1_ref[...]
    w2 = w2_ref[...]
    b2 = b2_ref[...]

    def chunk(n, off):
        xs = x_ref[n, :, pl.ds(off, sub)]                         # (C_in, sub)
        h = jnp.dot(w1, xs, preferred_element_type=jnp.float32)   # (hid, sub) f32
        h = jnp.maximum(h + b1, 0.0)                               # bias + ReLU (f32)
        o = jnp.dot(w2, h.astype(w2.dtype),
                    preferred_element_type=jnp.float32)            # (C_out, sub) f32
        o_ref[n, :, pl.ds(off, sub)] = (o + b2).astype(o_ref.dtype)

    for n in range(n_batch):          # N is a small static int for this module
        if n_chunks == 1:
            chunk(n, 0)
        else:
            def body(i, carry, n=n):
                chunk(n, pl.multiple_of(i * sub, 128))
                return carry
            jax.lax.fori_loop(0, n_chunks, body, 0, unroll=n_chunks <= 8)


def mlp_forward(x_nchw, params, *, tile_spatial=8192):
    """x_nchw: (N, C_in, H, W). Returns (N, C_out, H, W). Eval-mode BatchNorm."""
    w1, b1, gamma, beta, run_mean, run_var, eps, w2, b2 = params
    N, C_in, H, W = x_nchw.shape
    hid = w1.shape[0]          # w1: (hid, C_in)   -- PyTorch Conv2d 1x1 layout
    C_out = w2.shape[0]        # w2: (C_out, hid)
    HW = H * W

    cdt = jnp.dtype(x_nchw.dtype)      # stream/compute dtype == x dtype (no wrapper cast)
    itm = cdt.itemsize

    # ---- fold BatchNorm (running stats) into fc1 weight & bias (one-time, tiny) ----
    inv_std = 1.0 / jnp.sqrt(run_var.astype(jnp.float32) + eps)
    s = gamma.astype(jnp.float32) * inv_std                        # (hid,)
    w1f = (w1.astype(jnp.float32) * s[:, None]).astype(cdt)
    b1f = (s * (b1.astype(jnp.float32) - run_mean.astype(jnp.float32))
           + beta.astype(jnp.float32)).reshape(hid, 1)             # f32
    w2f = w2.astype(cdt)
    b2f = b2.astype(jnp.float32).reshape(C_out, 1)                 # f32

    # ---- layout: keep NCHW, flatten spatial (pure reshape, no pad / copy) ----
    x3 = x_nchw.reshape(N, C_in, HW)

    # ---- generation-aware VMEM budget ----
    try:
        vmem_phys = int(pltpu.get_tpu_info().vmem_capacity_bytes)
    except Exception:                      # conservative fallback (v7x-sized)
        vmem_phys = 64 << 20
    vmem_cap = max(int(vmem_phys * 0.8), 16 << 20)   # ~51 MiB v7x, ~102 MiB v5e/v6e

    def rup(a, m):
        return (a + m - 1) // m * m

    subl = {4: 8, 2: 16, 1: 32}.get(itm, 8)          # sublane packing of cdt
    cin_p, cout_p, hid_p = rup(C_in, subl), rup(C_out, subl), rup(hid, subl)
    hid8, cout8 = rup(hid, 8), rup(C_out, 8)

    def pick_sub(tile):
        # lane sub-tile for the f32 intermediate h: keep hid*sub*4 <= ~2 MiB
        if tile < 128:
            return tile
        sub = 128
        while sub * 2 <= tile and hid8 * (sub * 2) * 4 <= (2 << 20):
            sub *= 2
        return sub

    def vmem_needed(tile, sub):
        xbuf = 2 * N * cin_p * tile * itm                       # double-buffered x
        obuf = 2 * N * cout_p * tile * itm                      # double-buffered out
        wts = (hid_p * rup(C_in, 128) + cout_p * rup(hid, 128)) * itm   # lane-padded weights
        bias = (hid8 + cout8) * 128 * 4                         # lane-padded f32 biases
        inter = (hid8 + cout8) * sub * 4 + rup(hid, 16) * sub * itm     # h(f32)+o(f32)+h cast
        return xbuf + obuf + wts + bias + inter

    # ---- spatial tile: power-of-two multiple of 128, shrunk to fit the budget ----
    if HW <= 128:
        tile = HW                                  # block == full dim (always legal)
    else:
        hw128 = rup(HW, 128)
        cap_tile = min(int(tile_spatial), hw128)
        tile = 128
        while tile * 2 <= cap_tile:
            tile *= 2
        while tile > 128 and vmem_needed(tile, pick_sub(tile)) * 3 // 2 > vmem_cap:
            tile //= 2
    sub = pick_sub(tile)
    n_tiles = pl.cdiv(HW, tile)

    needed = vmem_needed(tile, sub)
    per_step_x = N * cin_p * tile * itm
    # Third buffer on x only when per-step DMAs are tiny and headroom exists.
    use_buf3 = (n_tiles >= 4 and per_step_x <= (512 << 10)
                and (needed + per_step_x) * 3 // 2 <= vmem_cap)
    if use_buf3:
        needed += per_step_x
    vmem_limit = int(min(max(needed * 3 // 2, 1 << 20), vmem_cap))

    x_map = lambda t: (0, 0, t)
    if use_buf3:
        x_spec = pl.BlockSpec((N, C_in, tile), x_map, pipeline_mode=pl.Buffered(3))
    else:
        x_spec = pl.BlockSpec((N, C_in, tile), x_map)

    flops = 2 * N * HW * (C_in * hid + hid * C_out)
    bytes_accessed = int(N * HW * (C_in + C_out) * itm
                         + (hid * C_in + C_out * hid) * itm
                         + (hid + C_out) * 4)

    out3 = pl.pallas_call(
        partial(_mlp_kernel, sub=sub),
        out_shape=jax.ShapeDtypeStruct((N, C_out, HW), x_nchw.dtype),
        grid_spec=pltpu.PrefetchScalarGridSpec(
            num_scalar_prefetch=0,
            grid=(n_tiles,),                       # spatial-only grid (megacore-even)
            in_specs=[
                x_spec,                                           # x tile (ragged last ok)
                pl.BlockSpec((hid, C_in), lambda t: (0, 0)),      # w1 (BN folded), resident
                pl.BlockSpec((hid, 1), lambda t: (0, 0)),         # b1 (BN folded), f32
                pl.BlockSpec((C_out, hid), lambda t: (0, 0)),     # w2, resident
                pl.BlockSpec((C_out, 1), lambda t: (0, 0)),       # b2, f32
            ],
            out_specs=pl.BlockSpec((N, C_out, tile), lambda t: (0, 0, t)),
        ),
        compiler_params=pltpu.CompilerParams(
            dimension_semantics=("parallel",),
            vmem_limit_bytes=vmem_limit),
        cost_estimate=pl.CostEstimate(flops=flops, transcendentals=0,
                                      bytes_accessed=bytes_accessed),
    )(x3, w1f, b1f, w2f, b2f)

    return out3.reshape(N, C_out, H, W)            # already NCHW; no transpose/slice


def make_params(key, in_ch, out_ch=None):
    out_ch = out_ch or in_ch
    hid_ch = in_ch * 4
    ks = jax.random.split(key, 8)
    # Conv2d 1x1 weights stored in PyTorch (out_ch, in_ch) layout.
    w1 = jax.random.normal(ks[0], (hid_ch, in_ch), jnp.float32) * 0.1
    b1 = jax.random.normal(ks[1], (hid_ch,), jnp.float32) * 0.1
    gamma = 1.0 + 0.1 * jax.random.normal(ks[2], (hid_ch,), jnp.float32)
    beta = 0.1 * jax.random.normal(ks[3], (hid_ch,), jnp.float32)
    run_mean = 0.1 * jax.random.normal(ks[4], (hid_ch,), jnp.float32)
    run_var = jnp.abs(jax.random.normal(ks[5], (hid_ch,), jnp.float32)) + 0.5
    eps = 1e-5
    w2 = jax.random.normal(ks[6], (out_ch, hid_ch), jnp.float32) * 0.1
    b2 = jax.random.normal(ks[7], (out_ch,), jnp.float32) * 0.1
    return (w1, b1, gamma, beta, run_mean, run_var, eps, w2, b2)


def mlp_reference(x_nchw, params):
    """Pure-JAX reference of the same (eval-mode) forward, for sanity check."""
    w1, b1, gamma, beta, run_mean, run_var, eps, w2, b2 = params
    N, C, H, W = x_nchw.shape
    x = jnp.transpose(x_nchw, (0, 2, 3, 1)).reshape(-1, C).astype(jnp.float32)
    h = x @ w1.T + b1
    h = (h - run_mean) / jnp.sqrt(run_var + eps) * gamma + beta
    h = jnp.maximum(h, 0.0)
    o = h @ w2.T + b2
    o = o.reshape(N, H, W, -1)
    return jnp.transpose(o, (0, 3, 1, 2))


if __name__ == "__main__":
    key = jax.random.PRNGKey(0)
    kx, kp = jax.random.split(key)

    N, C_in, H, W = 2, 4, 16, 16   # small shapes consistent with the module
    x = jax.random.normal(kx, (N, C_in, H, W), jnp.float32)
    params = make_params(kp, C_in)

    ref = mlp_reference(x, params)

    # f32 streaming (x stays f32 end-to-end): exact check against the reference.
    out = jax.block_until_ready(mlp_forward(x, params))
    assert out.shape == (N, C_in, H, W)
    assert jnp.allclose(out, ref, atol=1e-4, rtol=1e-4)

    # bf16 streaming: the caller supplies a bf16 x (no wrapper-side cast);
    # weights are folded/cast once, MXU accumulates in f32.
    out_bf16 = jax.block_until_ready(mlp_forward(x.astype(jnp.bfloat16), params))
    assert out_bf16.shape == (N, C_in, H, W)
    assert jnp.allclose(out_bf16.astype(jnp.float32), ref, atol=5e-2, rtol=5e-2)

    print("KERNEL_OK")
</pallas_src>

<mosaic_0001>
module attributes {stable_mosaic.version = 11 : i64} {
  func.func @_mlp_kernel(%arg0: i32, %arg1: memref<2x4x256xf32, #tpu.memory_space<vmem>>, %arg2: memref<16x4xf32, #tpu.memory_space<vmem>>, %arg3: memref<16x1xf32, #tpu.memory_space<vmem>>, %arg4: memref<4x16xf32, #tpu.memory_space<vmem>>, %arg5: memref<4x1xf32, #tpu.memory_space<vmem>>, %arg6: memref<2x4x256xf32, #tpu.memory_space<vmem>>) attributes {dimension_semantics = [#tpu.dimension_semantics<parallel>], iteration_bounds = array<i64: 1>, scalar_prefetch = 0 : i64, scratch_operands = 0 : i64, tpu.core_type = #tpu.core_type<tc>, window_params = [{transform_indices = @transform_0, window_bounds = array<i64: 2, 4, 256>}, {pipeline_mode = #tpu.pipeline_mode<synchronous>, transform_indices = @transform_1, window_bounds = array<i64: 16, 4>}, {pipeline_mode = #tpu.pipeline_mode<synchronous>, transform_indices = @transform_2, window_bounds = array<i64: 16, 1>}, {pipeline_mode = #tpu.pipeline_mode<synchronous>, transform_indices = @transform_3, window_bounds = array<i64: 4, 16>}, {pipeline_mode = #tpu.pipeline_mode<synchronous>, transform_indices = @transform_4, window_bounds = array<i64: 4, 1>}, {transform_indices = @transform_5, window_bounds = array<i64: 2, 4, 256>}]} {
    %c0 = arith.constant 0 : index
    %c0_0 = arith.constant 0 : index
    %0 = vector.load %arg2[%c0, %c0_0] : memref<16x4xf32, #tpu.memory_space<vmem>>, vector<16x4xf32>
    %c0_1 = arith.constant 0 : index
    %c0_2 = arith.constant 0 : index
    %1 = vector.load %arg3[%c0_1, %c0_2] : memref<16x1xf32, #tpu.memory_space<vmem>>, vector<16x1xf32>
    %c0_3 = arith.constant 0 : index
    %c0_4 = arith.constant 0 : index
    %2 = vector.load %arg4[%c0_3, %c0_4] : memref<4x16xf32, #tpu.memory_space<vmem>>, vector<4x16xf32>
    %c0_5 = arith.constant 0 : index
    %c0_6 = arith.constant 0 : index
    %3 = vector.load %arg5[%c0_5, %c0_6] : memref<4x1xf32, #tpu.memory_space<vmem>>, vector<4x1xf32>
    %c0_7 = arith.constant 0 : index
    %c0_8 = arith.constant 0 : index
    %c0_9 = arith.constant 0 : index
    %4 = vector.load %arg1[%c0_7, %c0_8, %c0_9] : memref<2x4x256xf32, #tpu.memory_space<vmem>>, vector<1x4x256xf32>
    %5 = vector.shape_cast %4 : vector<1x4x256xf32> to vector<4x256xf32>
    %cst = arith.constant dense<0.000000e+00> : vector<16x256xf32>
    %6 = tpu.matmul %0, %5, %cst {dimension_numbers = #tpu.dot_dimension_numbers<[1], [0], [0], [1], [0, 0, 1, 1], [], []>} : vector<16x4xf32>, vector<4x256xf32>, vector<16x256xf32> -> vector<16x256xf32>
    %7 = vector.broadcast %1 : vector<16x1xf32> to vector<16x256xf32>
    %8 = arith.addf %6, %7 : vector<16x256xf32>
    %cst_10 = arith.constant 0.000000e+00 : f32
    %9 = vector.broadcast %cst_10 : f32 to vector<16x256xf32>
    %10 = arith.maximumf %8, %9 : vector<16x256xf32>
    %cst_11 = arith.constant dense<0.000000e+00> : vector<4x256xf32>
    %11 = tpu.matmul %2, %10, %cst_11 {dimension_numbers = #tpu.dot_dimension_numbers<[1], [0], [0], [1], [0, 0, 1, 1], [], []>} : vector<4x16xf32>, vector<16x256xf32>, vector<4x256xf32> -> vector<4x256xf32>
    %12 = vector.broadcast %3 : vector<4x1xf32> to vector<4x256xf32>
    %13 = arith.addf %11, %12 : vector<4x256xf32>
    %c0_12 = arith.constant 0 : index
    %c0_13 = arith.constant 0 : index
    %c0_14 = arith.constant 0 : index
    %14 = vector.load %arg6[%c0_12, %c0_13, %c0_14] : memref<2x4x256xf32, #tpu.memory_space<vmem>>, vector<1x4x256xf32>
    %15 = vector.shape_cast %14 : vector<1x4x256xf32> to vector<4x256xf32>
    %16 = vector.shape_cast %13 : vector<4x256xf32> to vector<1x4x256xf32>
    tpu.vector_store %arg6[%c0_12, %c0_13, %c0_14], %16 {strides = array<i32>} : memref<2x4x256xf32, #tpu.memory_space<vmem>>, vector<1x4x256xf32>,
    %c1 = arith.constant 1 : index
    %c0_15 = arith.constant 0 : index
    %c0_16 = arith.constant 0 : index
    %17 = vector.load %arg1[%c1, %c0_15, %c0_16] : memref<2x4x256xf32, #tpu.memory_space<vmem>>, vector<1x4x256xf32>
    %18 = vector.shape_cast %17 : vector<1x4x256xf32> to vector<4x256xf32>
    %cst_17 = arith.constant dense<0.000000e+00> : vector<16x256xf32>
    %19 = tpu.matmul %0, %18, %cst_17 {dimension_numbers = #tpu.dot_dimension_numbers<[1], [0], [0], [1], [0, 0, 1, 1], [], []>} : vector<16x4xf32>, vector<4x256xf32>, vector<16x256xf32> -> vector<16x256xf32>
    %20 = vector.broadcast %1 : vector<16x1xf32> to vector<16x256xf32>
    %21 = arith.addf %19, %20 : vector<16x256xf32>
    %cst_18 = arith.constant 0.000000e+00 : f32
    %22 = vector.broadcast %cst_18 : f32 to vector<16x256xf32>
    %23 = arith.maximumf %21, %22 : vector<16x256xf32>
    %cst_19 = arith.constant dense<0.000000e+00> : vector<4x256xf32>
    %24 = tpu.matmul %2, %23, %cst_19 {dimension_numbers = #tpu.dot_dimension_numbers<[1], [0], [0], [1], [0, 0, 1, 1], [], []>} : vector<4x16xf32>, vector<16x256xf32>, vector<4x256xf32> -> vector<4x256xf32>
    %25 = vector.broadcast %3 : vector<4x1xf32> to vector<4x256xf32>
    %26 = arith.addf %24, %25 : vector<4x256xf32>
    %c1_20 = arith.constant 1 : index
    %c0_21 = arith.constant 0 : index
    %c0_22 = arith.constant 0 : index
    %27 = vector.load %arg6[%c1_20, %c0_21, %c0_22] : memref<2x4x256xf32, #tpu.memory_space<vmem>>, vector<1x4x256xf32>
    %28 = vector.shape_cast %27 : vector<1x4x256xf32> to vector<4x256xf32>
    %29 = vector.shape_cast %26 : vector<4x256xf32> to vector<1x4x256xf32>
    tpu.vector_store %arg6[%c1_20, %c0_21, %c0_22], %29 {strides = array<i32>} : memref<2x4x256xf32, #tpu.memory_space<vmem>>, vector<1x4x256xf32>,
    return
  }
  func.func @transform_0(%arg0: i32) -> (i32, i32, i32) {
    %c0_i32 = arith.constant 0 : i32
    %c0_i32_0 = arith.constant 0 : i32
    %c0_i32_1 = arith.constant 0 : i32
    return %c0_i32, %c0_i32_0, %arg0 : i32, i32, i32
  }
  func.func @transform_1(%arg0: i32) -> (i32, i32) {
    %c0_i32 = arith.constant 0 : i32
    %c0_i32_0 = arith.constant 0 : i32
    %c0_i32_1 = arith.constant 0 : i32
    return %c0_i32, %c0_i32_0 : i32, i32
  }
  func.func @transform_2(%arg0: i32) -> (i32, i32) {
    %c0_i32 = arith.constant 0 : i32
    %c0_i32_0 = arith.constant 0 : i32
    %c0_i32_1 = arith.constant 0 : i32
    return %c0_i32, %c0_i32_0 : i32, i32
  }
  func.func @transform_3(%arg0: i32) -> (i32, i32) {
    %c0_i32 = arith.constant 0 : i32
    %c0_i32_0 = arith.constant 0 : i32
    %c0_i32_1 = arith.constant 0 : i32
    return %c0_i32, %c0_i32_0 : i32, i32
  }
  func.func @transform_4(%arg0: i32) -> (i32, i32) {
    %c0_i32 = arith.constant 0 : i32
    %c0_i32_0 = arith.constant 0 : i32
    %c0_i32_1 = arith.constant 0 : i32
    return %c0_i32, %c0_i32_0 : i32, i32
  }
  func.func @transform_5(%arg0: i32) -> (i32, i32, i32) {
    %c0_i32 = arith.constant 0 : i32
    %c0_i32_0 = arith.constant 0 : i32
    %c0_i32_1 = arith.constant 0 : i32
    return %c0_i32, %c0_i32_0, %arg0 : i32, i32, i32
  }
}

</mosaic_0001>

<llo_original>
// kernel: tpu_custom_call.1
$region0: #{tpu_custom_call.1}
  #allocation0 [shape = 'u32[]', space=smem, size = 0x4, offset = 0x4, fixed_abs, tag = 'smem constant byte address 0x4 - core index']
  #allocation1 [shape = 'u32[144,128]{1,0:T(1,128)}', space=vmem, size = 0x12000, scoped, tag = 'internal scratch']
  %s0 = inlined_call_operand.vmem [shape: f32[2,4,256], index: 0, kind: input, shape index: {}]
  %s1 = inlined_call_operand.vmem [shape: f32[16,4], index: 1, kind: input, shape index: {}]
  %s2 = inlined_call_operand.vmem [shape: f32[16,1], index: 2, kind: input, shape index: {}]
  %s3 = inlined_call_operand.vmem [shape: f32[4,16], index: 3, kind: input, shape index: {}]
  %s4 = inlined_call_operand.vmem [shape: f32[4,1], index: 4, kind: input, shape index: {}]
  %s5 = inlined_call_operand.hbm [shape: f32[2,4,256], index: 5, kind: output, shape index: {}]
  %s6 = sld [smem:[#allocation0]]
  $region30: #{tpu_custom_call.1} parent=0
    _
  %s8 = ssub.s32 1, %s6
  %s9 = scalar_select 0, %s8, %s6
  $region1: #{tpu_custom_call.1} parent=0
    #allocation2 [shape = 'u8[8192]{0}', space=vmem, size = 0x2000, scoped, tag = 'output window, operand 0, single buffered']
    #allocation3 [shape = 's32[1]{0}', space=sflag, size = 0x4, scoped, tag = 'scoped memory for tpu_custom_call.1']
    %10 = vsyncpa [#allocation3], 0
    // Predicated region
    $region2: #{tpu_custom_call.1} parent=1 // pred_check
      _
    $region3: #{tpu_custom_call.1} parent=1 // pred_check_branch
      %12 = sbr.rel (0) target = $region5
    $region4: #{tpu_custom_call.1} parent=1 // pred_region
      _
    $region5: #{tpu_custom_call.1} parent=1 // pred_fallthru
      _
    // Predicated region
    $region6: #{tpu_custom_call.1} parent=1 // pred_check
      _
    $region7: #{tpu_custom_call.1} parent=1 // pred_check_branch
      %14 = sbr.rel (0) target = $region9
    $region8: #{tpu_custom_call.1} parent=1 // pred_region
      _
    $region9: #{tpu_custom_call.1} parent=1 // pred_fallthru
      _
    // Predicated region
    $region10: #{tpu_custom_call.1} parent=1 // pred_check
      _
    $region11: #{tpu_custom_call.1} parent=1 // pred_check_branch
      %16 = sbr.rel (0) target = $region13
    $region12: #{tpu_custom_call.1} parent=1 // pred_region
      _
    $region13: #{tpu_custom_call.1} parent=1 // pred_fallthru
      _
    // Predicated region
    $region14: #{tpu_custom_call.1} parent=1 // pred_check
      _
    $region15: #{tpu_custom_call.1} parent=1 // pred_check_branch
      %18 = sbr.rel (0) target = $region17
    $region16: #{tpu_custom_call.1} parent=1 // pred_region
      _
    $region17: #{tpu_custom_call.1} parent=1 // pred_fallthru
      _
    // Predicated region
    $region18: #{tpu_custom_call.1} parent=1 // pred_check
      _
    $region19: #{tpu_custom_call.1} parent=1 // pred_check_branch
      %20 = sbr.rel (0) target = $region21
    $region20: #{tpu_custom_call.1} parent=1 // pred_region
      _
    $region21: #{tpu_custom_call.1} parent=1 // pred_fallthru
      _
    %v21 = vld [vmem:[%s1] sm:$0xff]
    %v22 = vld [vmem:[%s1 + $0x8] sm:$0xff]
    %v23 = vld [vmem:[%s2] sm:$0xff]
    %v24 = vld [vmem:[%s2 + $0x8] sm:$0xff]
    %v25 = vld [vmem:[%s3] sm:$0xf]
    %v26 = vld [vmem:[%s4] sm:$0xf]
    %v27 = vld [vmem:[%s0] sm:$0xff]
    %29 = vset.pattern.permute.xlu0 0
    %30 = vperm.xlu0 %29, %v23
    %v31 = vpop.permute.xlu0 %30
    %34 = vset.pattern.permute.xlu0 0
    %35 = vperm.xlu0 %34, %v24
    %v36 = vpop.permute.xlu0 %35
    %v39 = vcombine.high %v27, %v27
    %vm40 = vcmask 31744
    %v42 = vsel %vm40, %v21, 0
    %v45 = vsel %vm40, %v22, 0
    %vm47 = vcmask 1043456
    %v48 = vsel %vm47, %v27, 0
    %v50 = vsel %vm47, %v39, 0
    %52 = vmatprep.subr.mxu0 0.0
    %53 = vmatpush1.msra.mxu0 0.0
    %54 = vmatprep.subr.mxu0 0.0
    %55 = vmatpush1.msra.mxu0 0.0
    %56 = vmatprep.subr.mxu0 0.0
    %57 = vmatpush1.msra.mxu0 0.0
    %58 = vmatprep.subr.mxu0 0.0
    %59 = vmatpush1.msra.mxu0 0.0
    %60 = vmatprep.subr.mxu0 0.0
    %61 = vmatpush1.msra.mxu0 0.0
    %62 = vmatprep.subr.mxu0 0.0
    %63 = vmatpush1.msra.mxu0 0.0
    %64 = vmatprep.subr.mxu0 0.0
    %65 = vmatpush1.msra.mxu0 0.0
    %66 = vmatprep.subr.mxu0 0.0
    %67 = vmatpush1.msra.mxu0 0.0
    %68 = vmatprep.subr.mxu0 0.0
    %69 = vmatpush1.msra.mxu0 0.0
    %70 = vmatprep.subr.mxu0 0.0
    %71 = vmatpush1.msra.mxu0 0.0
    %72 = vmatprep.subr.mxu0 0.0
    %73 = vmatpush1.msra.mxu0 0.0
    %74 = vmatprep.subr.mxu0 0.0
    %75 = vmatpush1.msra.mxu0 0.0
    %76 = vmatprep.subr.mxu0 0.0
    %77 = vmatpush1.msra.mxu0 0.0
    %78 = vmatprep.subr.mxu0 0.0
    %79 = vmatpush1.msra.mxu0 0.0
    %80 = vmatprep.subr.mxu0 0.0
    %81 = vmatpush1.msra.mxu0 0.0
    %82 = vmatprep.subr.mxu0 %v50
    %83 = vmatpush1.msra.mxu0 %v48
    %84 = vmatprep.subr.mxu0 0.0
    %85 = vmatpush2.msra.mxu0 0.0
    %86 = vmatprep.subr.mxu0 0.0
    %87 = vmatpush2.msra.mxu0 0.0
    %88 = vmatprep.subr.mxu0 0.0
    %89 = vmatpush2.msra.mxu0 0.0
    %90 = vmatprep.subr.mxu0 0.0
    %91 = vmatpush2.msra.mxu0 0.0
    %92 = vmatprep.subr.mxu0 0.0
    %93 = vmatpush2.msra.mxu0 0.0
    %94 = vmatprep.subr.mxu0 0.0
    %95 = vmatpush2.msra.mxu0 0.0
    %96 = vmatprep.subr.mxu0 0.0
    %97 = vmatpush2.msra.mxu0 0.0
    %98 = vmatprep.subr.mxu0 0.0
    %99 = vmatpush2.msra.mxu0 0.0
    %100 = vmatprep.subr.mxu0 0.0
    %101 = vmatpush2.msra.mxu0 0.0
    %102 = vmatprep.subr.mxu0 0.0
    %103 = vmatpush2.msra.mxu0 0.0
    %104 = vmatprep.subr.mxu0 0.0
    %105 = vmatpush2.msra.mxu0 0.0
    %106 = vmatprep.subr.mxu0 0.0
    %107 = vmatpush2.msra.mxu0 0.0
    %108 = vmatprep.subr.mxu0 0.0
    %109 = vmatpush2.msra.mxu0 0.0
    %110 = vmatprep.subr.mxu0 0.0
    %111 = vmatpush2.msra.mxu0 0.0
    %112 = vmatprep.subr.mxu0 0.0
    %113 = vmatpush2.msra.mxu0 0.0
    %114 = vmatprep.subr.mxu0 0.0
    %115 = vmatpush2.msra.mxu0 0.0
    %116 = vmatprep.mubr.f32.mxu0 0.0
    %117 = vmatmul.mubr.f32.gmra.mxu0 %v42
    %v118 = vpop.f32.mrf.mxu0
    %v119 = vadd.f32 %v31, %v118
    %v120 = vpop.f32.mrf.mxu0
    %v121 = vadd.f32 %v31, %v120
    %122 = vmatprep.mubr.f32.mxu0 0.0
    %123 = vmatmul.mubr.f32.gmra.mxu0 %v45
    %v124 = vpop.f32.mrf.mxu0
    %v125 = vadd.f32 %v36, %v124
    %v126 = vpop.f32.mrf.mxu0
    %v127 = vadd.f32 %v36, %v126
    %128 = vdwg.mxu0
    %v129 = vmax.f32 %v119, 0.0
    %v130 = vmax.f32 %v121, 0.0
    %v131 = vmax.f32 %v125, 0.0
    %v132 = vmax.f32 %v127, 0.0
    %134 = vset.pattern.permute.xlu0 0
    %135 = vperm.xlu0 %134, %v26
    %v136 = vpop.permute.xlu0 %135
    %vm138 = vcmask 130048
    %v140 = vsel %vm138, %v25, 0
    %142 = vmatprep.subr.mxu0 0.0
    %143 = vmatpush1.msra.mxu0 0.0
    %144 = vmatprep.subr.mxu0 0.0
    %145 = vmatpush1.msra.mxu0 0.0
    %146 = vmatprep.subr.mxu0 0.0
    %147 = vmatpush1.msra.mxu0 0.0
    %148 = vmatprep.subr.mxu0 0.0
    %149 = vmatpush1.msra.mxu0 0.0
    %150 = vmatprep.subr.mxu0 0.0
    %151 = vmatpush1.msra.mxu0 0.0
    %152 = vmatprep.subr.mxu0 0.0
    %153 = vmatpush1.msra.mxu0 0.0
    %154 = vmatprep.subr.mxu0 0.0
    %155 = vmatpush1.msra.mxu0 0.0
    %156 = vmatprep.subr.mxu0 0.0
    %157 = vmatpush1.msra.mxu0 0.0
    %158 = vmatprep.subr.mxu0 0.0
    %159 = vmatpush1.msra.mxu0 0.0
    %160 = vmatprep.subr.mxu0 0.0
    %161 = vmatpush1.msra.mxu0 0.0
    %162 = vmatprep.subr.mxu0 0.0
    %163 = vmatpush1.msra.mxu0 0.0
    %164 = vmatprep.subr.mxu0 0.0
    %165 = vmatpush1.msra.mxu0 0.0
    %166 = vmatprep.subr.mxu0 0.0
    %167 = vmatpush1.msra.mxu0 0.0
    %168 = vmatprep.subr.mxu0 0.0
    %169 = vmatpush1.msra.mxu0 0.0
    %170 = vmatprep.subr.mxu0 %v132
    %171 = vmatpush1.msra.mxu0 %v131
    %172 = vmatprep.subr.mxu0 %v130
    %173 = vmatpush1.msra.mxu0 %v129
    %174 = vmatprep.subr.mxu0 0.0
    %175 = vmatpush2.msra.mxu0 0.0
    %176 = vmatprep.subr.mxu0 0.0
    %177 = vmatpush2.msra.mxu0 0.0
    %178 = vmatprep.subr.mxu0 0.0
    %179 = vmatpush2.msra.mxu0 0.0
    %180 = vmatprep.subr.mxu0 0.0
    %181 = vmatpush2.msra.mxu0 0.0
    %182 = vmatprep.subr.mxu0 0.0
    %183 = vmatpush2.msra.mxu0 0.0
    %184 = vmatprep.subr.mxu0 0.0
    %185 = vmatpush2.msra.mxu0 0.0
    %186 = vmatprep.subr.mxu0 0.0
    %187 = vmatpush2.msra.mxu0 0.0
    %188 = vmatprep.subr.mxu0 0.0
    %189 = vmatpush2.msra.mxu0 0.0
    %190 = vmatprep.subr.mxu0 0.0
    %191 = vmatpush2.msra.mxu0 0.0
    %192 = vmatprep.subr.mxu0 0.0
    %193 = vmatpush2.msra.mxu0 0.0
    %194 = vmatprep.subr.mxu0 0.0
    %195 = vmatpush2.msra.mxu0 0.0
    %196 = vmatprep.subr.mxu0 0.0
    %197 = vmatpush2.msra.mxu0 0.0
    %198 = vmatprep.subr.mxu0 0.0
    %199 = vmatpush2.msra.mxu0 0.0
    %200 = vmatprep.subr.mxu0 0.0
    %201 = vmatpush2.msra.mxu0 0.0
    %202 = vmatprep.subr.mxu0 0.0
    %203 = vmatpush2.msra.mxu0 0.0
    %204 = vmatprep.subr.mxu0 0.0
    %205 = vmatpush2.msra.mxu0 0.0
    %206 = vmatprep.mubr.f32.mxu0 0.0
    %207 = vmatmul.mubr.f32.gmra.mxu0 %v140
    %v208 = vpop.f32.mrf.mxu0
    %v209 = vadd.f32 %v136, %v208
    %v210 = vpop.f32.mrf.mxu0
    %v211 = vadd.f32 %v136, %v210
    %212 = vdwg.mxu0
    %v215 = vcombine.low %v209, %v211
    %217 = vst [vmem:[#allocation2] sm:$0xff] %v215
    %s218 = scalar_lea.vmem %s0, 8
    %v219 = vld [vmem:[%s218] sm:$0xff]
    %v221 = vcombine.high %v219, %v219
    %v222 = vsel %vm47, %v219, 0
    %v224 = vsel %vm47, %v221, 0
    %226 = vmatprep.subr.mxu0 0.0
    %227 = vmatpush1.msra.mxu0 0.0
    %228 = vmatprep.subr.mxu0 0.0
    %229 = vmatpush1.msra.mxu0 0.0
    %230 = vmatprep.subr.mxu0 0.0
    %231 = vmatpush1.msra.mxu0 0.0
    %232 = vmatprep.subr.mxu0 0.0
    %233 = vmatpush1.msra.mxu0 0.0
    %234 = vmatprep.subr.mxu0 0.0
    %235 = vmatpush1.msra.mxu0 0.0
    %236 = vmatprep.subr.mxu0 0.0
    %237 = vmatpush1.msra.mxu0 0.0
    %238 = vmatprep.subr.mxu0 0.0
    %239 = vmatpush1.msra.mxu0 0.0
    %240 = vmatprep.subr.mxu0 0.0
    %241 = vmatpush1.msra.mxu0 0.0
    %242 = vmatprep.subr.mxu0 0.0
    %243 = vmatpush1.msra.mxu0 0.0
    %244 = vmatprep.subr.mxu0 0.0
    %245 = vmatpush1.msra.mxu0 0.0
    %246 = vmatprep.subr.mxu0 0.0
    %247 = vmatpush1.msra.mxu0 0.0
    %248 = vmatprep.subr.mxu0 0.0
    %249 = vmatpush1.msra.mxu0 0.0
    %250 = vmatprep.subr.mxu0 0.0
    %251 = vmatpush1.msra.mxu0 0.0
    %252 = vmatprep.subr.mxu0 0.0
    %253 = vmatpush1.msra.mxu0 0.0
    %254 = vmatprep.subr.mxu0 0.0
    %255 = vmatpush1.msra.mxu0 0.0
    %256 = vmatprep.subr.mxu0 %v224
    %257 = vmatpush1.msra.mxu0 %v222
    %258 = vmatprep.subr.mxu0 0.0
    %259 = vmatpush2.msra.mxu0 0.0
    %260 = vmatprep.subr.mxu0 0.0
    %261 = vmatpush2.msra.mxu0 0.0
    %262 = vmatprep.subr.mxu0 0.0
    %263 = vmatpush2.msra.mxu0 0.0
    %264 = vmatprep.subr.mxu0 0.0
    %265 = vmatpush2.msra.mxu0 0.0
    %266 = vmatprep.subr.mxu0 0.0
    %267 = vmatpush2.msra.mxu0 0.0
    %268 = vmatprep.subr.mxu0 0.0
    %269 = vmatpush2.msra.mxu0 0.0
    %270 = vmatprep.subr.mxu0 0.0
    %271 = vmatpush2.msra.mxu0 0.0
    %272 = vmatprep.subr.mxu0 0.0
    %273 = vmatpush2.msra.mxu0 0.0
    %274 = vmatprep.subr.mxu0 0.0
    %275 = vmatpush2.msra.mxu0 0.0
    %276 = vmatprep.subr.mxu0 0.0
    %277 = vmatpush2.msra.mxu0 0.0
    %278 = vmatprep.subr.mxu0 0.0
    %279 = vmatpush2.msra.mxu0 0.0
    %280 = vmatprep.subr.mxu0 0.0
    %281 = vmatpush2.msra.mxu0 0.0
    %282 = vmatprep.subr.mxu0 0.0
    %283 = vmatpush2.msra.mxu0 0.0
    %284 = vmatprep.subr.mxu0 0.0
    %285 = vmatpush2.msra.mxu0 0.0
    %286 = vmatprep.subr.mxu0 0.0
    %287 = vmatpush2.msra.mxu0 0.0
    %288 = vmatprep.subr.mxu0 0.0
    %289 = vmatpush2.msra.mxu0 0.0
    %290 = vmatprep.mubr.f32.mxu0 0.0
    %291 = vmatmul.mubr.f32.gmra.mxu0 %v42
    %v292 = vpop.f32.mrf.mxu0
    %v293 = vadd.f32 %v31, %v292
    %v294 = vpop.f32.mrf.mxu0
    %v295 = vadd.f32 %v31, %v294
    %296 = vmatprep.mubr.f32.mxu0 0.0
    %297 = vmatmul.mubr.f32.gmra.mxu0 %v45
    %v298 = vpop.f32.mrf.mxu0
    %v299 = vadd.f32 %v36, %v298
    %v300 = vpop.f32.mrf.mxu0
    %v301 = vadd.f32 %v36, %v300
    %302 = vdwg.mxu0
    %v303 = vmax.f32 %v293, 0.0
    %v304 = vmax.f32 %v295, 0.0
    %v305 = vmax.f32 %v299, 0.0
    %v306 = vmax.f32 %v301, 0.0
    %307 = vmatprep.subr.mxu0 0.0
    %308 = vmatpush1.msra.mxu0 0.0
    %309 = vmatprep.subr.mxu0 0.0
    %310 = vmatpush1.msra.mxu0 0.0
    %311 = vmatprep.subr.mxu0 0.0
    %312 = vmatpush1.msra.mxu0 0.0
    %313 = vmatprep.subr.mxu0 0.0
    %314 = vmatpush1.msra.mxu0 0.0
    %315 = vmatprep.subr.mxu0 0.0
    %316 = vmatpush1.msra.mxu0 0.0
    %317 = vmatprep.subr.mxu0 0.0
    %318 = vmatpush1.msra.mxu0 0.0
    %319 = vmatprep.subr.mxu0 0.0
    %320 = vmatpush1.msra.mxu0 0.0
    %321 = vmatprep.subr.mxu0 0.0
    %322 = vmatpush1.msra.mxu0 0.0
    %323 = vmatprep.subr.mxu0 0.0
    %324 = vmatpush1.msra.mxu0 0.0
    %325 = vmatprep.subr.mxu0 0.0
    %326 = vmatpush1.msra.mxu0 0.0
    %327 = vmatprep.subr.mxu0 0.0
    %328 = vmatpush1.msra.mxu0 0.0
    %329 = vmatprep.subr.mxu0 0.0
    %330 = vmatpush1.msra.mxu0 0.0
    %331 = vmatprep.subr.mxu0 0.0
    %332 = vmatpush1.msra.mxu0 0.0
    %333 = vmatprep.subr.mxu0 0.0
    %334 = vmatpush1.msra.mxu0 0.0
    %335 = vmatprep.subr.mxu0 %v306
    %336 = vmatpush1.msra.mxu0 %v305
    %337 = vmatprep.subr.mxu0 %v304
    %338 = vmatpush1.msra.mxu0 %v303
    %339 = vmatprep.subr.mxu0 0.0
    %340 = vmatpush2.msra.mxu0 0.0
    %341 = vmatprep.subr.mxu0 0.0
    %342 = vmatpush2.msra.mxu0 0.0
    %343 = vmatprep.subr.mxu0 0.0
    %344 = vmatpush2.msra.mxu0 0.0
    %345 = vmatprep.subr.mxu0 0.0
    %346 = vmatpush2.msra.mxu0 0.0
    %347 = vmatprep.subr.mxu0 0.0
    %348 = vmatpush2.msra.mxu0 0.0
    %349 = vmatprep.subr.mxu0 0.0
    %350 = vmatpush2.msra.mxu0 0.0
    %351 = vmatprep.subr.mxu0 0.0
    %352 = vmatpush2.msra.mxu0 0.0
    %353 = vmatprep.subr.mxu0 0.0
    %354 = vmatpush2.msra.mxu0 0.0
    %355 = vmatprep.subr.mxu0 0.0
    %356 = vmatpush2.msra.mxu0 0.0
    %357 = vmatprep.subr.mxu0 0.0
    %358 = vmatpush2.msra.mxu0 0.0
    %359 = vmatprep.subr.mxu0 0.0
    %360 = vmatpush2.msra.mxu0 0.0
    %361 = vmatprep.subr.mxu0 0.0
    %362 = vmatpush2.msra.mxu0 0.0
    %363 = vmatprep.subr.mxu0 0.0
    %364 = vmatpush2.msra.mxu0 0.0
    %365 = vmatprep.subr.mxu0 0.0
    %366 = vmatpush2.msra.mxu0 0.0
    %367 = vmatprep.subr.mxu0 0.0
    %368 = vmatpush2.msra.mxu0 0.0
    %369 = vmatprep.subr.mxu0 0.0
    %370 = vmatpush2.msra.mxu0 0.0
    %371 = vmatprep.mubr.f32.mxu0 0.0
    %372 = vmatmul.mubr.f32.gmra.mxu0 %v140
    %v373 = vpop.f32.mrf.mxu0
    %v374 = vadd.f32 %v136, %v373
    %v375 = vpop.f32.mrf.mxu0
    %v376 = vadd.f32 %v136, %v375
    %377 = vdwg.mxu0
    %v380 = vcombine.low %v374, %v376
    %s382 = scalar_lea.vmem [#allocation2], 8
    %383 = vst [vmem:[%s382] sm:$0xff] %v380
    // Predicated region
    $region22: #{tpu_custom_call.1} parent=1 // pred_check
      _
    $region23: #{tpu_custom_call.1} parent=1 // pred_check_branch
      %385 = sbr.rel (0) target = $region25
    $region24: #{tpu_custom_call.1} parent=1 // pred_region
      %s387 = ssub.s32 256, 256
      %388 = vsyncadd [#allocation3], %s387
      %s389 = sshll.u32 [#allocation2], 4
      %s390 = int_to_ptr.vmem [resolvable:$true] %s389
      %395 = dma.vmem_to_hbm [thread:$0]  %s390, 256, %s5, [#allocation3], 128, 128, 8
    $region25: #{tpu_custom_call.1} parent=1 // pred_fallthru
      _
    // Predicated region
    $region26: #{tpu_custom_call.1} parent=1 // pred_check
      _
    $region27: #{tpu_custom_call.1} parent=1 // pred_check_branch
      %397 = sbr.rel (0) target = $region29
    $region28: #{tpu_custom_call.1} parent=1 // pred_region
      %398 = dma.done [#allocation3], 256
    $region29: #{tpu_custom_call.1} parent=1 // pred_fallthru
      _
    %399 = vsyncpa [#allocation3], 1

</llo_original>
